<compile_context>
chip_gen: v6e
topology: v6e:2x2x1
jax: 0.10.0
libtpu: 0.0.40
codegen_flags: <defaults>
</compile_context>

<pallas_src>
import functools

import jax
import jax.numpy as jnp
import numpy as np
from jax import lax
from jax.experimental import pallas as pl
from jax.experimental.pallas import tpu as pltpu

KERNEL_SIZE = 7
PAD = KERNEL_SIZE // 2  # padding=3 for kernel_size=7 (matches the PyTorch module)


def _round_up(n, m):
    return -(-n // m) * m


# ----------------------------------------------------------------------------
# Kernel 1: streaming channel reduction (sum -> mean, max) on (N, C, H*W).
# ----------------------------------------------------------------------------
def reduce_kernel(x_ref, o_ref, *, inv_c, c_sub):
    # x_ref : (n_tile, c_tile, HW) input chunk (native dtype, lane-dense)
    # o_ref : (n_tile, 2, HW) f32 [sum->avg ; max] planes.  The output block
    #         index is constant along the channel grid axis, so this block is
    #         resident in VMEM and doubles as the running accumulator.
    c_idx = pl.program_id(1)
    nt, c_blk, hw = x_ref.shape

    @pl.when(c_idx == 0)
    def _init():
        o_ref[:, 0:1, :] = jnp.zeros((nt, 1, hw), jnp.float32)
        o_ref[:, 1:2, :] = jnp.full((nt, 1, hw), -jnp.inf, jnp.float32)

    s = o_ref[:, 0:1, :]
    m = o_ref[:, 1:2, :]
    # Fold the chunk in small channel sub-blocks: keeps the live f32 upcast
    # temporary to (nt, c_sub, hw) instead of the whole chunk (matters for
    # bf16 inputs / vreg pressure); max runs in the native dtype with one
    # upcast per sub-block.  All slices are static and 8-aligned.
    for j in range(0, c_blk, c_sub):
        je = min(j + c_sub, c_blk)
        blk = x_ref[:, j:je, :]
        s = s + jnp.sum(blk.astype(jnp.float32), axis=1, keepdims=True)
        m = jnp.maximum(m, jnp.max(blk, axis=1, keepdims=True).astype(jnp.float32))
    o_ref[:, 0:1, :] = s
    o_ref[:, 1:2, :] = m

    @pl.when(c_idx == pl.num_programs(1) - 1)
    def _finalize():
        o_ref[:, 0:1, :] = o_ref[:, 0:1, :] * jnp.float32(inv_c)


# ----------------------------------------------------------------------------
# Kernel 2: per-image 7x7 conv(2->1) + sigmoid on the [avg; max] planes.
# ----------------------------------------------------------------------------
def conv_kernel(p_ref, w_ref, o_ref, pad_ref):
    # p_ref   : (1, 2, H, W) f32 [avg; max] planes of one image
    # w_ref   : (2*K*K,) f32 conv weight (OIHW flattened) in SMEM
    #           (no index_map -> staged into SMEM once, not re-DMA'd per step)
    # o_ref   : (1, 1, H, W) output tile (x.dtype)
    # pad_ref : (2, H+2*PAD, W+2*PAD) f32 zero-padded planes
    h, w = o_ref.shape[2], o_ref.shape[3]

    pad_ref[...] = jnp.zeros_like(pad_ref)
    pad_ref[0, PAD:PAD + h, PAD:PAD + w] = p_ref[0, 0]
    pad_ref[1, PAD:PAD + h, PAD:PAD + w] = p_ref[0, 1]

    # 7x7 x 2-channel conv as unrolled shift-and-accumulate on the VPU, split
    # over 4 independent partial accumulators (ILP across the 4 VALU slots
    # instead of one 98-deep dependent add chain).  One output channel keeps
    # the MXU off; this kernel runs once per image and is far off the
    # HBM-bound hot path, so static-slice taps are fine here.
    accs = [jnp.zeros((h, w), jnp.float32) for _ in range(4)]
    t = 0
    for cidx in range(2):
        base = cidx * KERNEL_SIZE * KERNEL_SIZE
        for ki in range(KERNEL_SIZE):
            for kj in range(KERNEL_SIZE):
                wgt = w_ref[base + ki * KERNEL_SIZE + kj]  # SMEM scalar
                accs[t % 4] = accs[t % 4] + wgt * pad_ref[cidx, ki:ki + h, kj:kj + w]
                t += 1
    acc = (accs[0] + accs[1]) + (accs[2] + accs[3])
    o_ref[0, 0] = jax.nn.sigmoid(acc).astype(o_ref.dtype)


# ----------------------------------------------------------------------------
# Tiling / VMEM budgeting (generation-aware).
# ----------------------------------------------------------------------------
def _vmem_capacity_bytes():
    try:
        cap = getattr(pltpu.get_tpu_info(), "vmem_capacity_bytes", None)
        if cap:
            return int(cap)
    except Exception:
        pass
    return 64 * 1024 * 1024  # conservative (v7x-sized) fallback


def _pick_tiles(N, C, HW, dtype, input_budget_bytes):
    itemsize = jnp.dtype(dtype).itemsize
    pack = 8 * max(1, 4 // itemsize)  # sublane packing: 8 f32, 16 bf16, 32 int8
    hwp = _round_up(HW, 128)

    def in_block_bytes(nt, ct):
        return nt * _round_up(ct, pack) * hwp * itemsize  # real itemsize (bf16-aware)

    # Largest c_tile dividing C that (a) satisfies the (8,128) block rule
    # (multiple of 8 or == C) and (b) fits double-buffered in the budget.
    c_tile = 8 if C % 8 == 0 else C
    for t in range(1, C + 1):
        if C % t:
            continue
        if (t % 8 == 0 or t == C) and 2 * in_block_bytes(1, t) <= input_budget_bytes:
            c_tile = max(c_tile, t)

    # If a whole image's channels fit in one small block, batch several images
    # per grid step to amortize the ~0.35us fixed per-step overhead.
    n_tile = 1
    if c_tile == C:
        for t in range(1, N + 1):
            if N % t:
                continue
            if (in_block_bytes(t, C) <= (1 << 20)
                    and 2 * in_block_bytes(t, C) <= input_budget_bytes):
                n_tile = t
    return n_tile, c_tile


# ----------------------------------------------------------------------------
# Wrapper
# ----------------------------------------------------------------------------
def spatial_attention(x, conv_weight, *, c_tile=None, n_tile=None):
    """x: (N, C, H, W).  conv_weight: (1, 2, K, K) float (OIHW, no bias)."""
    N, C, H, W = x.shape
    assert conv_weight.shape == (1, 2, KERNEL_SIZE, KERNEL_SIZE)
    HW = H * W
    itemsize = jnp.dtype(x.dtype).itemsize
    w_flat = conv_weight.reshape(-1).astype(jnp.float32)  # (2*K*K,)

    vmem_cap = _vmem_capacity_bytes()
    # ~40% of VMEM for the double-buffered input stream:
    #   v5e/v6e (128 MiB) -> ~51 MiB ; v7x (64 MiB) -> ~25 MiB.
    input_budget = int(0.40 * vmem_cap)

    auto_nt, auto_ct = _pick_tiles(N, C, HW, x.dtype, input_budget)
    if c_tile is None:
        c_tile = auto_ct
    if n_tile is None:
        n_tile = auto_nt if c_tile == C else 1
    assert C % c_tile == 0 and N % n_tile == 0
    assert c_tile % 8 == 0 or c_tile == C, "c_tile must satisfy the (8,128) rule"
    n_c = C // c_tile

    pack = 8 * max(1, 4 // itemsize)
    hwp = _round_up(HW, 128)
    in_block = n_tile * _round_up(c_tile, pack) * hwp * itemsize
    out_block = n_tile * 8 * hwp * 4
    need = 2 * in_block + 2 * out_block + (1 << 20)
    # Cap at 80% of physical VMEM: ~102 MiB on v5e/v6e, ~51 MiB on v7x
    # (leaves headroom for compiler-internal scratch on v7x).
    vmem_limit = int(min(0.80 * vmem_cap, max(32 << 20, 2 * need)))

    reduce_cost = pl.CostEstimate(
        flops=int(2 * N * C * HW),            # running sum + running max
        transcendentals=0,
        bytes_accessed=int(N * C * HW * itemsize + N * 2 * HW * 4),
    )
    kernel1 = functools.partial(reduce_kernel, inv_c=1.0 / C, c_sub=min(c_tile, 8))

    # Lane-dense view for the heavy pass (contiguous reshape, free in XLA).
    x_flat = x.reshape(N, C, HW)

    # NOTE: the channel axis MUST stay the innermost grid axis, marked
    # "arbitrary", with a constant output block index along it -- the output
    # block is the running [sum; max] accumulator.  Reordering / marking it
    # "parallel" silently breaks the result.
    # Default double-buffering is enough now that the conv epilogue is
    # unfused; bump in_specs[0] with pipeline_mode=pl.Buffered(3) if DMA gaps
    # still show at image boundaries.
    # TODO(synk): for N == 1 on v7x (2 TensorCores) split the channel or HW
    # axis across cores (core_map / CORE_PARALLEL) with a cross-core combine.
    planes = pl.pallas_call(
        kernel1,
        out_shape=jax.ShapeDtypeStruct((N, 2, HW), jnp.float32),
        grid_spec=pltpu.PrefetchScalarGridSpec(
            num_scalar_prefetch=0,
            grid=(N // n_tile, n_c),
            in_specs=[pl.BlockSpec((n_tile, c_tile, HW), lambda n, c: (n, c, 0))],
            out_specs=pl.BlockSpec((n_tile, 2, HW), lambda n, c: (n, 0, 0)),
        ),
        compiler_params=pltpu.CompilerParams(
            dimension_semantics=("parallel", "arbitrary"),
            vmem_limit_bytes=vmem_limit,
        ),
        cost_estimate=reduce_cost,
    )(x_flat)

    conv_cost = pl.CostEstimate(
        flops=int(4 * N * KERNEL_SIZE * KERNEL_SIZE * HW),
        transcendentals=int(N * HW),          # sigmoid
        bytes_accessed=int(N * 2 * HW * 4 + N * HW * itemsize + w_flat.size * 4),
    )

    out = pl.pallas_call(
        conv_kernel,
        out_shape=jax.ShapeDtypeStruct((N, 1, H, W), x.dtype),
        grid_spec=pltpu.PrefetchScalarGridSpec(
            num_scalar_prefetch=0,
            grid=(N,),
            in_specs=[
                pl.BlockSpec((1, 2, H, W), lambda n: (n, 0, 0, 0)),
                pl.BlockSpec(memory_space=pltpu.MemorySpace.SMEM),
            ],
            out_specs=pl.BlockSpec((1, 1, H, W), lambda n: (n, 0, 0, 0)),
            scratch_shapes=[
                pltpu.VMEM((2, H + 2 * PAD, W + 2 * PAD), jnp.float32),
            ],
        ),
        compiler_params=pltpu.CompilerParams(
            dimension_semantics=("parallel",),
        ),
        cost_estimate=conv_cost,
    )(planes.reshape(N, 2, H, W), w_flat)

    return out


def spatial_attention_ref(x, conv_weight):
    """Pure-JAX reference mirroring the PyTorch forward."""
    avg_out = jnp.mean(x, axis=1, keepdims=True)
    max_out = jnp.max(x, axis=1, keepdims=True)
    feat = jnp.concatenate([avg_out, max_out], axis=1)  # (N, 2, H, W)
    y = lax.conv_general_dilated(
        feat, conv_weight, window_strides=(1, 1),
        padding=[(PAD, PAD), (PAD, PAD)],
        dimension_numbers=("NCHW", "OIHW", "NCHW"))
    return jax.nn.sigmoid(y)


if __name__ == "__main__":
    key = jax.random.PRNGKey(0)
    kx, kw, kx2 = jax.random.split(key, 3)

    # Deterministic conv weight (Conv2d(2, 1, 7, bias=False) -> (1, 2, 7, 7)).
    fan_in = 2 * KERNEL_SIZE * KERNEL_SIZE
    bound = 1.0 / np.sqrt(fan_in)
    conv_weight = jax.random.uniform(
        kw, (1, 2, KERNEL_SIZE, KERNEL_SIZE),
        minval=-bound, maxval=bound, dtype=jnp.float32)

    # Small case implied by the module spec.
    N, C, H, W = 2, 4, 16, 16
    x = jax.random.normal(kx, (N, C, H, W), dtype=jnp.float32)
    out = jax.block_until_ready(spatial_attention(x, conv_weight))
    ref = jax.block_until_ready(spatial_attention_ref(x, conv_weight))
    np.testing.assert_allclose(np.asarray(out), np.asarray(ref), atol=1e-5, rtol=1e-5)

    # Exercise the multi-step channel-accumulator path (C=24 in 3 tiles of 8).
    x2 = jax.random.normal(kx2, (2, 24, H, W), dtype=jnp.float32)
    out2 = jax.block_until_ready(spatial_attention(x2, conv_weight, c_tile=8))
    ref2 = jax.block_until_ready(spatial_attention_ref(x2, conv_weight))
    np.testing.assert_allclose(np.asarray(out2), np.asarray(ref2), atol=1e-5, rtol=1e-5)

    print("KERNEL_OK")
</pallas_src>

<mosaic_0001>
module attributes {stable_mosaic.version = 11 : i64} {
  func.func @reduce_kernel(%arg0: i32, %arg1: i32, %arg2: memref<2x4x256xf32, #tpu.memory_space<vmem>>, %arg3: memref<2x2x256xf32, #tpu.memory_space<vmem>>) attributes {dimension_semantics = [#tpu.dimension_semantics<parallel>, #tpu.dimension_semantics<arbitrary>], iteration_bounds = array<i64: 1, 1>, scalar_prefetch = 0 : i64, scratch_operands = 0 : i64, tpu.core_type = #tpu.core_type<tc>, window_params = [{transform_indices = @transform_0, window_bounds = array<i64: 2, 4, 256>}, {transform_indices = @transform_1, window_bounds = array<i64: 2, 2, 256>}]} {
    %c0_i32 = arith.constant 0 : i32
    %0 = arith.cmpi eq, %arg1, %c0_i32 : i32
    %1 = arith.extui %0 : i1 to i32
    %c0_i32_0 = arith.constant 0 : i32
    %2 = arith.cmpi ne, %1, %c0_i32_0 : i32
    scf.if %2 {
      %cst_17 = arith.constant 0.000000e+00 : f32
      %17 = vector.broadcast %cst_17 : f32 to vector<2x1x256xf32>
      %c0_18 = arith.constant 0 : index
      %c0_19 = arith.constant 0 : index
      %c0_20 = arith.constant 0 : index
      %18 = vector.load %arg3[%c0_18, %c0_19, %c0_20] : memref<2x2x256xf32, #tpu.memory_space<vmem>>, vector<2x1x256xf32>
      tpu.vector_store %arg3[%c0_18, %c0_19, %c0_20], %17 {strides = array<i32>} : memref<2x2x256xf32, #tpu.memory_space<vmem>>, vector<2x1x256xf32>,
      %cst_21 = arith.constant 0xFF800000 : f32
      %19 = vector.broadcast %cst_21 : f32 to vector<2x1x256xf32>
      %c0_22 = arith.constant 0 : index
      %c1_23 = arith.constant 1 : index
      %c0_24 = arith.constant 0 : index
      %20 = vector.load %arg3[%c0_22, %c1_23, %c0_24] : memref<2x2x256xf32, #tpu.memory_space<vmem>>, vector<2x1x256xf32>
      tpu.vector_store %arg3[%c0_22, %c1_23, %c0_24], %19 {strides = array<i32>} : memref<2x2x256xf32, #tpu.memory_space<vmem>>, vector<2x1x256xf32>,
    } else {
    }
    %c0 = arith.constant 0 : index
    %c0_1 = arith.constant 0 : index
    %c0_2 = arith.constant 0 : index
    %3 = vector.load %arg3[%c0, %c0_1, %c0_2] : memref<2x2x256xf32, #tpu.memory_space<vmem>>, vector<2x1x256xf32>
    %c0_3 = arith.constant 0 : index
    %c1 = arith.constant 1 : index
    %c0_4 = arith.constant 0 : index
    %4 = vector.load %arg3[%c0_3, %c1, %c0_4] : memref<2x2x256xf32, #tpu.memory_space<vmem>>, vector<2x1x256xf32>
    %c0_5 = arith.constant 0 : index
    %c0_6 = arith.constant 0 : index
    %c0_7 = arith.constant 0 : index
    %5 = vector.load %arg2[%c0_5, %c0_6, %c0_7] : memref<2x4x256xf32, #tpu.memory_space<vmem>>, vector<2x4x256xf32>
    %cst = arith.constant dense<0.000000e+00> : vector<2x256xf32>
    %6 = vector.multi_reduction <add>, %5, %cst [1] : vector<2x4x256xf32> to vector<2x256xf32>
    %7 = vector.shape_cast %6 : vector<2x256xf32> to vector<2x1x256xf32>
    %8 = arith.addf %3, %7 : vector<2x1x256xf32>
    %cst_8 = arith.constant dense<0xFF800000> : vector<2x256xf32>
    %9 = vector.multi_reduction <maximumf>, %5, %cst_8 [1] : vector<2x4x256xf32> to vector<2x256xf32>
    %10 = vector.shape_cast %9 : vector<2x256xf32> to vector<2x1x256xf32>
    %11 = arith.maximumf %4, %10 : vector<2x1x256xf32>
    %c0_9 = arith.constant 0 : index
    %c0_10 = arith.constant 0 : index
    %c0_11 = arith.constant 0 : index
    %12 = vector.load %arg3[%c0_9, %c0_10, %c0_11] : memref<2x2x256xf32, #tpu.memory_space<vmem>>, vector<2x1x256xf32>
    tpu.vector_store %arg3[%c0_9, %c0_10, %c0_11], %8 {strides = array<i32>} : memref<2x2x256xf32, #tpu.memory_space<vmem>>, vector<2x1x256xf32>,
    %c0_12 = arith.constant 0 : index
    %c1_13 = arith.constant 1 : index
    %c0_14 = arith.constant 0 : index
    %13 = vector.load %arg3[%c0_12, %c1_13, %c0_14] : memref<2x2x256xf32, #tpu.memory_space<vmem>>, vector<2x1x256xf32>
    tpu.vector_store %arg3[%c0_12, %c1_13, %c0_14], %11 {strides = array<i32>} : memref<2x2x256xf32, #tpu.memory_space<vmem>>, vector<2x1x256xf32>,
    %c0_i32_15 = arith.constant 0 : i32
    %14 = arith.cmpi eq, %arg1, %c0_i32_15 : i32
    %15 = arith.extui %14 : i1 to i32
    %c0_i32_16 = arith.constant 0 : i32
    %16 = arith.cmpi ne, %15, %c0_i32_16 : i32
    scf.if %16 {
      %c0_17 = arith.constant 0 : index
      %c0_18 = arith.constant 0 : index
      %c0_19 = arith.constant 0 : index
      %17 = vector.load %arg3[%c0_17, %c0_18, %c0_19] : memref<2x2x256xf32, #tpu.memory_space<vmem>>, vector<2x1x256xf32>
      %cst_20 = arith.constant 2.500000e-01 : f32
      %18 = vector.broadcast %cst_20 : f32 to vector<2x1x256xf32>
      %19 = arith.mulf %17, %18 : vector<2x1x256xf32>
      %c0_21 = arith.constant 0 : index
      %c0_22 = arith.constant 0 : index
      %c0_23 = arith.constant 0 : index
      %20 = vector.load %arg3[%c0_21, %c0_22, %c0_23] : memref<2x2x256xf32, #tpu.memory_space<vmem>>, vector<2x1x256xf32>
      tpu.vector_store %arg3[%c0_21, %c0_22, %c0_23], %19 {strides = array<i32>} : memref<2x2x256xf32, #tpu.memory_space<vmem>>, vector<2x1x256xf32>,
    } else {
    }
    return
  }
  func.func @transform_0(%arg0: i32, %arg1: i32) -> (i32, i32, i32) {
    %c0_i32 = arith.constant 0 : i32
    %c0_i32_0 = arith.constant 0 : i32
    return %arg0, %arg1, %c0_i32 : i32, i32, i32
  }
  func.func @transform_1(%arg0: i32, %arg1: i32) -> (i32, i32, i32) {
    %c0_i32 = arith.constant 0 : i32
    %c0_i32_0 = arith.constant 0 : i32
    %c0_i32_1 = arith.constant 0 : i32
    return %arg0, %c0_i32, %c0_i32_0 : i32, i32, i32
  }
}

</mosaic_0001>

<llo_original>
// kernel: tpu_custom_call.1
$region0: #{tpu_custom_call.1}
  #allocation0 [shape = 'u32[]', space=smem, size = 0x4, offset = 0x4, fixed_abs, tag = 'smem constant byte address 0x4 - core index']
  #allocation1 [shape = 'u32[144,128]{1,0:T(1,128)}', space=vmem, size = 0x12000, scoped, tag = 'internal scratch']
  %s0 = inlined_call_operand.hbm [shape: f32[2,4,256], index: 0, kind: input, shape index: {}]
  %s1 = inlined_call_operand.hbm [shape: f32[2,2,256], index: 1, kind: output, shape index: {}]
  %s2 = sld [smem:[#allocation0]]
  $region26: #{tpu_custom_call.1} parent=0
    _
  %s4 = ssub.s32 1, %s2
  %s5 = scalar_select 0, %s4, %s2
  $region1: #{tpu_custom_call.1} parent=0
    #allocation2 [shape = 'u8[8192]{0}', space=vmem, size = 0x2000, scoped, tag = 'input window, operand 0, single buffered']
    #allocation3 [shape = 's32[1]{0}', space=sflag, size = 0x4, scoped, tag = 'scoped memory for tpu_custom_call.1']
    #allocation4 [shape = 's32[1]{0}', space=sflag, size = 0x4, scoped, tag = 'scoped memory for tpu_custom_call.1']
    #allocation5 [shape = 'u8[4096]{0}', space=vmem, size = 0x1000, scoped, tag = 'output window, operand 0, single buffered']
    %6 = vsyncpa [#allocation3], 0
    %7 = vsyncpa [#allocation4], 0
    // Predicated region
    $region2: #{tpu_custom_call.1} parent=1 // pred_check
      _
    $region3: #{tpu_custom_call.1} parent=1 // pred_check_branch
      %9 = sbr.rel (0) target = $region5
    $region4: #{tpu_custom_call.1} parent=1 // pred_region
      %s11 = ssub.s32 256, 256
      %12 = vsyncadd [#allocation3], %s11
      %s13 = sshll.u32 [#allocation2], 4
      %s14 = int_to_ptr.vmem [resolvable:$true] %s13
      %19 = dma.hbm_to_vmem [thread:$0]  %s0, 256, %s14, [#allocation3], 128, 128, 8
    $region5: #{tpu_custom_call.1} parent=1 // pred_fallthru
      _
    // Predicated region
    $region6: #{tpu_custom_call.1} parent=1 // pred_check
      _
    $region7: #{tpu_custom_call.1} parent=1 // pred_check_branch
      %21 = sbr.rel (0) target = $region9
    $region8: #{tpu_custom_call.1} parent=1 // pred_region
      %22 = dma.done [#allocation3], 256
    $region9: #{tpu_custom_call.1} parent=1 // pred_fallthru
      _
    %p23 = scmp.eq.s32.totalorder 0, 0
    // Predicated region
    $region10: #{tpu_custom_call.1} parent=1 // pred_check
      %p24 = pneg %p23
    $region11: #{tpu_custom_call.1} parent=1 // pred_check_branch
      %26 = sbr.rel (%p24) target = $region13
    $region12: #{tpu_custom_call.1} parent=1 // pred_region
      %v27 = vlaneseq
      %vm28 = vcmp.ge.s32.totalorder %v27, 0
      %vm29 = vcmp.lt.s32.totalorder %v27, 256
      %vm30 = vmand %vm28, %vm29
      %31 = vst.msk [vmem:[#allocation5] ss:$2 sm:$0x3] %vm30, 0.0
      %s32 = scalar_lea.vmem [#allocation5], 4
      %33 = vst.msk [vmem:[%s32] ss:$2 sm:$0x3] %vm30, 0.0
      %s34 = scalar_lea.vmem [#allocation5], 1
      %35 = vst.msk [vmem:[%s34] ss:$2 sm:$0x3] %vm30, -inf
      %s36 = scalar_lea.vmem [#allocation5], 5
      %37 = vst.msk [vmem:[%s36] ss:$2 sm:$0x3] %vm30, -inf
    $region13: #{tpu_custom_call.1} parent=1 // pred_fallthru
      _
    %v38 = vld [vmem:[#allocation5] ss:$2 sm:$0x3]
    %s39 = scalar_lea.vmem [#allocation5], 4
    %v40 = vld [vmem:[%s39] ss:$2 sm:$0x3]
    %s41 = scalar_lea.vmem [#allocation5], 1
    %v42 = vld [vmem:[%s41] ss:$2 sm:$0x3]
    %s43 = scalar_lea.vmem [#allocation5], 5
    %v44 = vld [vmem:[%s43] ss:$2 sm:$0x3]
    %v45 = vld [vmem:[#allocation2] sm:$0xff]
    %v46 = vld [vmem:[#allocation2 + $0x8] sm:$0xff]
    %v49 = vcombine.high %v45, %v45
    %v50 = vcombine.high %v46, %v46
    %vm53 = vcmask 1043456
    %v54 = vsel %vm53, %v45, 0.0
    %v55 = vrot.slane %v54, 4
    %v56 = vadd.f32 %v54, %v55
    %v57 = vrot.slane %v56, 2
    %v58 = vadd.f32 %v56, %v57
    %v59 = vrot.slane %v58, 1
    %v60 = vadd.f32 %v58, %v59
    %v61 = vsel %vm53, %v49, 0.0
    %v62 = vrot.slane %v61, 4
    %v63 = vadd.f32 %v61, %v62
    %v64 = vrot.slane %v63, 2
    %v65 = vadd.f32 %v63, %v64
    %v66 = vrot.slane %v65, 1
    %v67 = vadd.f32 %v65, %v66
    %v68 = vsel %vm53, %v46, 0.0
    %v69 = vrot.slane %v68, 4
    %v70 = vadd.f32 %v68, %v69
    %v71 = vrot.slane %v70, 2
    %v72 = vadd.f32 %v70, %v71
    %v73 = vrot.slane %v72, 1
    %v74 = vadd.f32 %v72, %v73
    %v75 = vsel %vm53, %v50, 0.0
    %v76 = vrot.slane %v75, 4
    %v77 = vadd.f32 %v75, %v76
    %v78 = vrot.slane %v77, 2
    %v79 = vadd.f32 %v77, %v78
    %v80 = vrot.slane %v79, 1
    %v81 = vadd.f32 %v79, %v80
    %v86 = vcombine.low %v60, %v67
    %v88 = vunpack.c.l.s4 1966171168
    %v89 = vunpack.c.0.s8 %v88
    %v90 = vlaneseq
    %v91 = vshrl.u32 %v90, 7
    %v92 = vsub.s32 %v89, %v91
    %v93 = vrot.slane %v86, %v92
    %v95 = vunpack.c.l.s4 1966171168
    %v96 = vunpack.c.0.s8 %v95
    %v97 = vlaneseq
    %v98 = vshrl.u32 %v97, 7
    %v99 = vsub.s32 %v96, %v98
    %v100 = vrot.slane %v93, %v99
    %v101 = vcombine.low %v74, %v81
    %v103 = vunpack.c.l.s4 1966171168
    %v104 = vunpack.c.0.s8 %v103
    %v105 = vlaneseq
    %v106 = vshrl.u32 %v105, 7
    %v107 = vsub.s32 %v104, %v106
    %v108 = vrot.slane %v101, %v107
    %v110 = vunpack.c.l.s4 1966171168
    %v111 = vunpack.c.0.s8 %v110
    %v112 = vlaneseq
    %v113 = vshrl.u32 %v112, 7
    %v114 = vsub.s32 %v111, %v113
    %v115 = vrot.slane %v108, %v114
    %v118 = vadd.f32 %v38, %v100
    %v119 = vadd.f32 %v40, %v115
    %v120 = vsel %vm53, %v45, -inf
    %v121 = vrot.slane %v120, 4
    %v122 = vmax.f32 %v120, %v121
    %v123 = vrot.slane %v122, 2
    %v124 = vmax.f32 %v122, %v123
    %v125 = vrot.slane %v124, 1
    %v126 = vmax.f32 %v124, %v125
    %v127 = vsel %vm53, %v49, -inf
    %v128 = vrot.slane %v127, 4
    %v129 = vmax.f32 %v127, %v128
    %v130 = vrot.slane %v129, 2
    %v131 = vmax.f32 %v129, %v130
    %v132 = vrot.slane %v131, 1
    %v133 = vmax.f32 %v131, %v132
    %v134 = vsel %vm53, %v46, -inf
    %v135 = vrot.slane %v134, 4
    %v136 = vmax.f32 %v134, %v135
    %v137 = vrot.slane %v136, 2
    %v138 = vmax.f32 %v136, %v137
    %v139 = vrot.slane %v138, 1
    %v140 = vmax.f32 %v138, %v139
    %v141 = vsel %vm53, %v50, -inf
    %v142 = vrot.slane %v141, 4
    %v143 = vmax.f32 %v141, %v142
    %v144 = vrot.slane %v143, 2
    %v145 = vmax.f32 %v143, %v144
    %v146 = vrot.slane %v145, 1
    %v147 = vmax.f32 %v145, %v146
    %v152 = vcombine.low %v126, %v133
    %v154 = vunpack.c.l.s4 1966171168
    %v155 = vunpack.c.0.s8 %v154
    %v156 = vlaneseq
    %v157 = vshrl.u32 %v156, 7
    %v158 = vsub.s32 %v155, %v157
    %v159 = vrot.slane %v152, %v158
    %v161 = vunpack.c.l.s4 1966171168
    %v162 = vunpack.c.0.s8 %v161
    %v163 = vlaneseq
    %v164 = vshrl.u32 %v163, 7
    %v165 = vsub.s32 %v162, %v164
    %v166 = vrot.slane %v159, %v165
    %v167 = vcombine.low %v140, %v147
    %v169 = vunpack.c.l.s4 1966171168
    %v170 = vunpack.c.0.s8 %v169
    %v171 = vlaneseq
    %v172 = vshrl.u32 %v171, 7
    %v173 = vsub.s32 %v170, %v172
    %v174 = vrot.slane %v167, %v173
    %v176 = vunpack.c.l.s4 1966171168
    %v177 = vunpack.c.0.s8 %v176
    %v178 = vlaneseq
    %v179 = vshrl.u32 %v178, 7
    %v180 = vsub.s32 %v177, %v179
    %v181 = vrot.slane %v174, %v180
    %v184 = vmax.f32 %v42, %v166
    %v185 = vmax.f32 %v44, %v181
    %v186 = vlaneseq
    %vm187 = vcmp.ge.s32.totalorder %v186, 0
    %vm188 = vcmp.lt.s32.totalorder %v186, 256
    %vm189 = vmand %vm187, %vm188
    %190 = vst.msk [vmem:[#allocation5] ss:$2 sm:$0x3] %vm189, %v118
    %191 = vst.msk [vmem:[%s39] ss:$2 sm:$0x3] %vm189, %v119
    %192 = vst.msk [vmem:[%s41] ss:$2 sm:$0x3] %vm189, %v184
    %193 = vst.msk [vmem:[%s43] ss:$2 sm:$0x3] %vm189, %v185
    // Predicated region
    $region14: #{tpu_custom_call.1} parent=1 // pred_check
      %p194 = pneg %p23
    $region15: #{tpu_custom_call.1} parent=1 // pred_check_branch
      %196 = sbr.rel (%p194) target = $region17
    $region16: #{tpu_custom_call.1} parent=1 // pred_region
      %v197 = vld [vmem:[#allocation5] ss:$2 sm:$0x3]
      %v198 = vld [vmem:[%s39] ss:$2 sm:$0x3]
      %v199 = vmul.f32 %v197, 0.25
      %v200 = vmul.f32 %v198, 0.25
      %201 = vst.msk [vmem:[#allocation5] ss:$2 sm:$0x3] %vm189, %v199
      %202 = vst.msk [vmem:[%s39] ss:$2 sm:$0x3] %vm189, %v200
    $region17: #{tpu_custom_call.1} parent=1 // pred_fallthru
      _
    // Predicated region
    $region18: #{tpu_custom_call.1} parent=1 // pred_check
      _
    $region19: #{tpu_custom_call.1} parent=1 // pred_check_branch
      %204 = sbr.rel (0) target = $region21
    $region20: #{tpu_custom_call.1} parent=1 // pred_region
      %s206 = ssub.s32 128, 128
      %207 = vsyncadd [#allocation4], %s206
      %s208 = sshll.u32 [#allocation5], 4
      %s209 = int_to_ptr.vmem [resolvable:$true] %s208
      %214 = dma.vmem_to_hbm [thread:$0]  %s209, 128, %s1, [#allocation4], 64, 64, 4
    $region21: #{tpu_custom_call.1} parent=1 // pred_fallthru
      _
    // Predicated region
    $region22: #{tpu_custom_call.1} parent=1 // pred_check
      _
    $region23: #{tpu_custom_call.1} parent=1 // pred_check_branch
      %216 = sbr.rel (0) target = $region25
    $region24: #{tpu_custom_call.1} parent=1 // pred_region
      %217 = dma.done [#allocation4], 128
    $region25: #{tpu_custom_call.1} parent=1 // pred_fallthru
      _
    %218 = vsyncpa [#allocation3], 1
    %219 = vsyncpa [#allocation4], 1

</llo_original>
